<compile_context>
chip_gen: v7x
topology: tpu7x:2x2x1
jax: 0.10.0
libtpu: 0.0.40
codegen_flags: <defaults>
</compile_context>

<pallas_src>
import functools

import jax
import jax.numpy as jnp
from jax.experimental import pallas as pl
from jax.experimental.pallas import tpu as pltpu

HIDDEN1 = 512
HIDDEN2 = 128
OUT_PAD = 128          # pad classifier head to a full lane width (128)
DEFAULT_TILE_B = 256   # batch rows per grid step (fits v5e/v6e/v7x budgets)


def _round_up(n, m):
    return ((n + m - 1) // m) * m


def ffnn_kernel(x_ref, w1_ref, b1_ref, w2_ref, b2_ref, w3_ref, b3_ref, o_ref):
    # x tile: (TILE_B, in) bf16; weights bf16 (VMEM-resident); biases f32 (1, N).
    x = x_ref[...]
    h1 = jnp.dot(x, w1_ref[...], preferred_element_type=jnp.float32) + b1_ref[...]
    h1 = jnp.maximum(h1, 0.0).astype(jnp.bfloat16)      # back to bf16 for the MXU
    h2 = jnp.dot(h1, w2_ref[...], preferred_element_type=jnp.float32) + b2_ref[...]
    h2 = jnp.maximum(h2, 0.0).astype(jnp.bfloat16)
    o_ref[...] = jnp.dot(h2, w3_ref[...], preferred_element_type=jnp.float32) + b3_ref[...]


@functools.partial(jax.jit, static_argnames=("out_size", "tile_b"))
def ffnn_forward(x, params, out_size, tile_b=DEFAULT_TILE_B):
    """x: [B, input_size] f32. params: bf16 weights (pre-transposed, padded head), f32 biases."""
    w1, b1 = params["w1"], params["b1"]
    w2, b2 = params["w2"], params["b2"]
    w3, b3 = params["w3"], params["b3"]
    B, in_size = x.shape

    # Batch tile: multiple of 8 sublanes, no larger than the (padded) batch.
    tile_b = min(tile_b, _round_up(B, 8))
    b_pad = _round_up(B, tile_b)
    if b_pad != B:
        x = jnp.pad(x, ((0, b_pad - B), (0, 0)))
    x = x.astype(jnp.bfloat16)

    grid = (b_pad // tile_b,)
    resident = lambda i: (0, 0)   # same block every grid step -> stays in VMEM

    out = pl.pallas_call(
        ffnn_kernel,
        out_shape=jax.ShapeDtypeStruct((b_pad, OUT_PAD), jnp.float32),
        grid=grid,
        in_specs=[
            pl.BlockSpec((tile_b, in_size), lambda i: (i, 0)),   # x (streamed, pipelined)
            pl.BlockSpec((in_size, HIDDEN1), resident),          # w1
            pl.BlockSpec((1, HIDDEN1), resident),                # b1
            pl.BlockSpec((HIDDEN1, HIDDEN2), resident),          # w2
            pl.BlockSpec((1, HIDDEN2), resident),                # b2
            pl.BlockSpec((HIDDEN2, OUT_PAD), resident),          # w3 (lane-padded)
            pl.BlockSpec((1, OUT_PAD), resident),                # b3 (lane-padded)
        ],
        out_specs=pl.BlockSpec((tile_b, OUT_PAD), lambda i: (i, 0)),
        compiler_params=pltpu.CompilerParams(
            dimension_semantics=("parallel",),   # lets v7x split batch over 2 TCs
        ),
    )(x, w1, b1, w2, b2, w3, b3)

    return out[:B, :out_size]


def init_params(key, input_size, output_size):
    """PyTorch nn.Linear-style init (uniform +-1/sqrt(fan_in)); weights stored
    pre-transposed [in, out] in bf16; head padded to OUT_PAD lanes; biases f32."""
    def linear(k, fan_in, fan_out, pad_out=None):
        kw, kb = jax.random.split(k)
        bound = 1.0 / jnp.sqrt(fan_in)
        w = jax.random.uniform(kw, (fan_in, fan_out), jnp.float32, -bound, bound)
        b = jax.random.uniform(kb, (1, fan_out), jnp.float32, -bound, bound)
        if pad_out is not None and pad_out > fan_out:
            w = jnp.pad(w, ((0, 0), (0, pad_out - fan_out)))
            b = jnp.pad(b, ((0, 0), (0, pad_out - fan_out)))
        return w, b

    k1, k2, k3 = jax.random.split(key, 3)
    w1, b1 = linear(k1, input_size, HIDDEN1)
    w2, b2 = linear(k2, HIDDEN1, HIDDEN2)
    w3, b3 = linear(k3, HIDDEN2, output_size, pad_out=OUT_PAD)
    return {
        "w1": w1.astype(jnp.bfloat16), "b1": b1,
        "w2": w2.astype(jnp.bfloat16), "b2": b2,
        "w3": w3.astype(jnp.bfloat16), "b3": b3,
    }


def ffnn_reference(x, p, out_size):
    """Pure-JAX f32 reference (weights upcast from the stored bf16 values)."""
    xb = x.astype(jnp.bfloat16).astype(jnp.float32)
    w1 = p["w1"].astype(jnp.float32)
    w2 = p["w2"].astype(jnp.float32)
    w3 = p["w3"].astype(jnp.float32)
    h1 = jnp.maximum(xb @ w1 + p["b1"], 0.0)
    h2 = jnp.maximum(h1 @ w2 + p["b2"], 0.0)
    out = h2 @ w3 + p["b3"]
    return out[:, :out_size]


if __name__ == "__main__":
    input_size = 32
    output_size = 10
    batch = 8

    key = jax.random.PRNGKey(0)
    kx, kp = jax.random.split(key)
    x = jax.random.normal(kx, (batch, input_size), jnp.float32)
    params = init_params(kp, input_size, output_size)

    out = ffnn_forward(x, params, output_size)
    out = jax.block_until_ready(out)

    ref = ffnn_reference(x, params, output_size)
    assert out.shape == (batch, output_size), f"bad shape {out.shape}"
    max_err = float(jnp.max(jnp.abs(out - ref)))
    # bf16 MXU inputs with f32 accumulation -> ~1e-2-level deviation vs f32 ref.
    assert max_err < 5e-2, f"mismatch vs reference (max abs err {max_err})"

    print("KERNEL_OK")
</pallas_src>

<mosaic_0001>
module attributes {stable_mosaic.version = 11 : i64} {
  func.func @ffnn_kernel(%arg0: i32, %arg1: memref<8x32xbf16, #tpu.memory_space<vmem>>, %arg2: memref<32x512xbf16, #tpu.memory_space<vmem>>, %arg3: memref<1x512xf32, #tpu.memory_space<vmem>>, %arg4: memref<512x128xbf16, #tpu.memory_space<vmem>>, %arg5: memref<1x128xf32, #tpu.memory_space<vmem>>, %arg6: memref<128x128xbf16, #tpu.memory_space<vmem>>, %arg7: memref<1x128xf32, #tpu.memory_space<vmem>>, %arg8: memref<8x128xf32, #tpu.memory_space<vmem>>) attributes {dimension_semantics = [#tpu.dimension_semantics<parallel>], iteration_bounds = array<i64: 1>, scalar_prefetch = 0 : i64, scratch_operands = 0 : i64, tpu.core_type = #tpu.core_type<tc>, window_params = [{transform_indices = @transform_0, window_bounds = array<i64: 8, 32>}, {pipeline_mode = #tpu.pipeline_mode<synchronous>, transform_indices = @transform_1, window_bounds = array<i64: 32, 512>}, {pipeline_mode = #tpu.pipeline_mode<synchronous>, transform_indices = @transform_2, window_bounds = array<i64: 1, 512>}, {pipeline_mode = #tpu.pipeline_mode<synchronous>, transform_indices = @transform_3, window_bounds = array<i64: 512, 128>}, {pipeline_mode = #tpu.pipeline_mode<synchronous>, transform_indices = @transform_4, window_bounds = array<i64: 1, 128>}, {pipeline_mode = #tpu.pipeline_mode<synchronous>, transform_indices = @transform_5, window_bounds = array<i64: 128, 128>}, {pipeline_mode = #tpu.pipeline_mode<synchronous>, transform_indices = @transform_6, window_bounds = array<i64: 1, 128>}, {transform_indices = @transform_7, window_bounds = array<i64: 8, 128>}]} {
    %c0 = arith.constant 0 : index
    %c0_0 = arith.constant 0 : index
    %0 = vector.load %arg1[%c0, %c0_0] : memref<8x32xbf16, #tpu.memory_space<vmem>>, vector<8x32xbf16>
    %c0_1 = arith.constant 0 : index
    %c0_2 = arith.constant 0 : index
    %1 = vector.load %arg2[%c0_1, %c0_2] : memref<32x512xbf16, #tpu.memory_space<vmem>>, vector<32x512xbf16>
    %cst = arith.constant dense<0.000000e+00> : vector<8x512xf32>
    %2 = tpu.matmul %0, %1, %cst {dimension_numbers = #tpu.dot_dimension_numbers<[1], [0], [0], [1], [0, 0, 1, 1], [], []>} : vector<8x32xbf16>, vector<32x512xbf16>, vector<8x512xf32> -> vector<8x512xf32>
    %c0_3 = arith.constant 0 : index
    %c0_4 = arith.constant 0 : index
    %3 = vector.load %arg3[%c0_3, %c0_4] : memref<1x512xf32, #tpu.memory_space<vmem>>, vector<1x512xf32>
    %4 = vector.broadcast %3 : vector<1x512xf32> to vector<8x512xf32>
    %5 = arith.addf %2, %4 : vector<8x512xf32>
    %cst_5 = arith.constant 0.000000e+00 : f32
    %6 = vector.broadcast %cst_5 : f32 to vector<8x512xf32>
    %7 = arith.maximumf %5, %6 : vector<8x512xf32>
    %8 = arith.truncf %7 : vector<8x512xf32> to vector<8x512xbf16>
    %c0_6 = arith.constant 0 : index
    %c0_7 = arith.constant 0 : index
    %9 = vector.load %arg4[%c0_6, %c0_7] : memref<512x128xbf16, #tpu.memory_space<vmem>>, vector<512x128xbf16>
    %cst_8 = arith.constant dense<0.000000e+00> : vector<8x128xf32>
    %10 = tpu.matmul %8, %9, %cst_8 {dimension_numbers = #tpu.dot_dimension_numbers<[1], [0], [0], [1], [0, 0, 1, 1], [], []>} : vector<8x512xbf16>, vector<512x128xbf16>, vector<8x128xf32> -> vector<8x128xf32>
    %c0_9 = arith.constant 0 : index
    %c0_10 = arith.constant 0 : index
    %11 = vector.load %arg5[%c0_9, %c0_10] : memref<1x128xf32, #tpu.memory_space<vmem>>, vector<1x128xf32>
    %12 = vector.broadcast %11 : vector<1x128xf32> to vector<8x128xf32>
    %13 = arith.addf %10, %12 : vector<8x128xf32>
    %cst_11 = arith.constant 0.000000e+00 : f32
    %14 = vector.broadcast %cst_11 : f32 to vector<8x128xf32>
    %15 = arith.maximumf %13, %14 : vector<8x128xf32>
    %16 = arith.truncf %15 : vector<8x128xf32> to vector<8x128xbf16>
    %c0_12 = arith.constant 0 : index
    %c0_13 = arith.constant 0 : index
    %17 = vector.load %arg6[%c0_12, %c0_13] : memref<128x128xbf16, #tpu.memory_space<vmem>>, vector<128x128xbf16>
    %cst_14 = arith.constant dense<0.000000e+00> : vector<8x128xf32>
    %18 = tpu.matmul %16, %17, %cst_14 {dimension_numbers = #tpu.dot_dimension_numbers<[1], [0], [0], [1], [0, 0, 1, 1], [], []>} : vector<8x128xbf16>, vector<128x128xbf16>, vector<8x128xf32> -> vector<8x128xf32>
    %c0_15 = arith.constant 0 : index
    %c0_16 = arith.constant 0 : index
    %19 = vector.load %arg7[%c0_15, %c0_16] : memref<1x128xf32, #tpu.memory_space<vmem>>, vector<1x128xf32>
    %20 = vector.broadcast %19 : vector<1x128xf32> to vector<8x128xf32>
    %21 = arith.addf %18, %20 : vector<8x128xf32>
    %c0_17 = arith.constant 0 : index
    %c0_18 = arith.constant 0 : index
    %22 = vector.load %arg8[%c0_17, %c0_18] : memref<8x128xf32, #tpu.memory_space<vmem>>, vector<8x128xf32>
    tpu.vector_store %arg8[%c0_17, %c0_18], %21 {strides = array<i32>} : memref<8x128xf32, #tpu.memory_space<vmem>>, vector<8x128xf32>,
    return
  }
  func.func @transform_0(%arg0: i32) -> (i32, i32) {
    %c0_i32 = arith.constant 0 : i32
    %c0_i32_0 = arith.constant 0 : i32
    return %arg0, %c0_i32 : i32, i32
  }
  func.func @transform_1(%arg0: i32) -> (i32, i32) {
    %c0_i32 = arith.constant 0 : i32
    %c0_i32_0 = arith.constant 0 : i32
    %c0_i32_1 = arith.constant 0 : i32
    return %c0_i32, %c0_i32_0 : i32, i32
  }
  func.func @transform_2(%arg0: i32) -> (i32, i32) {
    %c0_i32 = arith.constant 0 : i32
    %c0_i32_0 = arith.constant 0 : i32
    %c0_i32_1 = arith.constant 0 : i32
    return %c0_i32, %c0_i32_0 : i32, i32
  }
  func.func @transform_3(%arg0: i32) -> (i32, i32) {
    %c0_i32 = arith.constant 0 : i32
    %c0_i32_0 = arith.constant 0 : i32
    %c0_i32_1 = arith.constant 0 : i32
    return %c0_i32, %c0_i32_0 : i32, i32
  }
  func.func @transform_4(%arg0: i32) -> (i32, i32) {
    %c0_i32 = arith.constant 0 : i32
    %c0_i32_0 = arith.constant 0 : i32
    %c0_i32_1 = arith.constant 0 : i32
    return %c0_i32, %c0_i32_0 : i32, i32
  }
  func.func @transform_5(%arg0: i32) -> (i32, i32) {
    %c0_i32 = arith.constant 0 : i32
    %c0_i32_0 = arith.constant 0 : i32
    %c0_i32_1 = arith.constant 0 : i32
    return %c0_i32, %c0_i32_0 : i32, i32
  }
  func.func @transform_6(%arg0: i32) -> (i32, i32) {
    %c0_i32 = arith.constant 0 : i32
    %c0_i32_0 = arith.constant 0 : i32
    %c0_i32_1 = arith.constant 0 : i32
    return %c0_i32, %c0_i32_0 : i32, i32
  }
  func.func @transform_7(%arg0: i32) -> (i32, i32) {
    %c0_i32 = arith.constant 0 : i32
    %c0_i32_0 = arith.constant 0 : i32
    return %arg0, %c0_i32 : i32, i32
  }
}

</mosaic_0001>

<llo_original>
// kernel: ffnn_forward.1
$region0: #{ffnn_forward.1}
  #allocation0 [shape = 'u32[]', space=smem, size = 0x4, offset = 0x4, fixed_abs, tag = 'smem constant byte address 0x4 - core index']
  #allocation1 [shape = 'u32[144,128]{1,0:T(1,128)}', space=vmem, size = 0x12000, scoped, tag = 'internal scratch']
  %s0 = inlined_call_operand.vmem [shape: bf16[8,32], index: 0, kind: input, shape index: {}]
  %s1 = inlined_call_operand.hbm [shape: bf16[32,512], index: 1, kind: input, shape index: {}]
  %s2 = inlined_call_operand.vmem [shape: f32[1,512], index: 2, kind: input, shape index: {}]
  %s3 = inlined_call_operand.hbm [shape: bf16[512,128], index: 3, kind: input, shape index: {}]
  %s4 = inlined_call_operand.vmem [shape: f32[1,128], index: 4, kind: input, shape index: {}]
  %s5 = inlined_call_operand.hbm [shape: bf16[128,128], index: 5, kind: input, shape index: {}]
  %s6 = inlined_call_operand.vmem [shape: f32[1,128], index: 6, kind: input, shape index: {}]
  %s7 = inlined_call_operand.hbm [shape: f32[8,128], index: 7, kind: output, shape index: {}]
  %s8 = sld [smem:[#allocation0]]
  $region50: #{ffnn_forward.1} parent=0
    _
  %s10 = ssub.s32 1, %s8
  %s11 = scalar_select 0, %s10, %s8
  $region1: #{ffnn_forward.1} parent=0
    #allocation2 [shape = 'u8[32768]{0}', space=vmem, size = 0x8000, scoped, tag = 'input window, operand 1, single buffered']
    #allocation3 [shape = 's32[1]{0}', space=sflag, size = 0x4, scoped, tag = 'scoped memory for ffnn_forward.1']
    #allocation4 [shape = 's32[1]{0}', space=sflag, size = 0x4, scoped, tag = 'scoped memory for ffnn_forward.1']
    #allocation5 [shape = 'u8[131072]{0}', space=vmem, size = 0x20000, scoped, tag = 'input window, operand 3, single buffered']
    #allocation6 [shape = 's32[1]{0}', space=sflag, size = 0x4, scoped, tag = 'scoped memory for ffnn_forward.1']
    #allocation7 [shape = 'u8[32768]{0}', space=vmem, size = 0x8000, scoped, tag = 'input window, operand 5, single buffered']
    #allocation8 [shape = 'u8[4096]{0}', space=vmem, size = 0x1000, scoped, tag = 'output window, operand 0, single buffered']
    %12 = vsyncpa [#allocation3], 0
    %13 = vsyncpa [#allocation6], 0
    %14 = vsyncpa [#allocation4], 0
    // Predicated region
    $region2: #{ffnn_forward.1} parent=1 // pred_check
      _
    $region3: #{ffnn_forward.1} parent=1 // pred_check_branch
      %16 = sbr.rel (0) target = $region5
    $region4: #{ffnn_forward.1} parent=1 // pred_region
      _
    $region5: #{ffnn_forward.1} parent=1 // pred_fallthru
      _
    // Predicated region
    $region6: #{ffnn_forward.1} parent=1 // pred_check
      _
    $region7: #{ffnn_forward.1} parent=1 // pred_check_branch
      %18 = sbr.rel (0) target = $region9
    $region8: #{ffnn_forward.1} parent=1 // pred_region
      %s20 = ssub.s32 1024, 1024
      %21 = vsyncadd [#allocation3], %s20
      %s22 = sshll.u32 [#allocation2], 4
      %s23 = int_to_ptr.vmem [resolvable:$true] %s22
      %28 = dma.hbm_to_vmem [thread:$0]  %s1, 1024, %s23, [#allocation3], 256, 256, 16
    $region9: #{ffnn_forward.1} parent=1 // pred_fallthru
      _
    // Predicated region
    $region10: #{ffnn_forward.1} parent=1 // pred_check
      _
    $region11: #{ffnn_forward.1} parent=1 // pred_check_branch
      %30 = sbr.rel (0) target = $region13
    $region12: #{ffnn_forward.1} parent=1 // pred_region
      _
    $region13: #{ffnn_forward.1} parent=1 // pred_fallthru
      _
    // Predicated region
    $region14: #{ffnn_forward.1} parent=1 // pred_check
      _
    $region15: #{ffnn_forward.1} parent=1 // pred_check_branch
      %32 = sbr.rel (0) target = $region17
    $region16: #{ffnn_forward.1} parent=1 // pred_region
      %s34 = ssub.s32 4096, 4096
      %35 = vsyncadd [#allocation6], %s34
      %s36 = sshll.u32 [#allocation5], 4
      %s37 = int_to_ptr.vmem [resolvable:$true] %s36
      %42 = dma.hbm_to_vmem [thread:$0]  %s3, 4096, %s37, [#allocation6], 64, 64, 4
    $region17: #{ffnn_forward.1} parent=1 // pred_fallthru
      _
    // Predicated region
    $region18: #{ffnn_forward.1} parent=1 // pred_check
      _
    $region19: #{ffnn_forward.1} parent=1 // pred_check_branch
      %44 = sbr.rel (0) target = $region21
    $region20: #{ffnn_forward.1} parent=1 // pred_region
      _
    $region21: #{ffnn_forward.1} parent=1 // pred_fallthru
      _
    // Predicated region
    $region22: #{ffnn_forward.1} parent=1 // pred_check
      _
    $region23: #{ffnn_forward.1} parent=1 // pred_check_branch
      %46 = sbr.rel (0) target = $region25
    $region24: #{ffnn_forward.1} parent=1 // pred_region
      %s48 = ssub.s32 1024, 1024
      %49 = vsyncadd [#allocation6], %s48
      %s50 = sshll.u32 [#allocation7], 4
      %s51 = int_to_ptr.vmem [resolvable:$true] %s50
      %56 = dma.hbm_to_vmem [thread:$0]  %s5, 1024, %s51, [#allocation6], 64, 64, 4
    $region25: #{ffnn_forward.1} parent=1 // pred_fallthru
      _
    // Predicated region
    $region26: #{ffnn_forward.1} parent=1 // pred_check
      _
    $region27: #{ffnn_forward.1} parent=1 // pred_check_branch
      %58 = sbr.rel (0) target = $region29
    $region28: #{ffnn_forward.1} parent=1 // pred_region
      _
    $region29: #{ffnn_forward.1} parent=1 // pred_fallthru
      _
    // Predicated region
    $region30: #{ffnn_forward.1} parent=1 // pred_check
      _
    $region31: #{ffnn_forward.1} parent=1 // pred_check_branch
      %60 = sbr.rel (0) target = $region33
    $region32: #{ffnn_forward.1} parent=1 // pred_region
      %61 = dma.done [#allocation3], 1024
    $region33: #{ffnn_forward.1} parent=1 // pred_fallthru
      _
    // Predicated region
    $region34: #{ffnn_forward.1} parent=1 // pred_check
      _
    $region35: #{ffnn_forward.1} parent=1 // pred_check_branch
      %63 = sbr.rel (0) target = $region37
    $region36: #{ffnn_forward.1} parent=1 // pred_region
      %64 = dma.done [#allocation6], 4096
    $region37: #{ffnn_forward.1} parent=1 // pred_fallthru
      _
    // Predicated region
    $region38: #{ffnn_forward.1} parent=1 // pred_check
      _
    $region39: #{ffnn_forward.1} parent=1 // pred_check_branch
      %66 = sbr.rel (0) target = $region41
    $region40: #{ffnn_forward.1} parent=1 // pred_region
      %67 = dma.done [#allocation6], 1024
    $region41: #{ffnn_forward.1} parent=1 // pred_fallthru
      _
    %v69 = vld [vmem:[%s0] sm:$0xf]
    %v70 = vld [vmem:[#allocation2] sm:$0xff]
    %v71 = vld [vmem:[#allocation2 + $0x8] sm:$0xff]
    %v72 = vld [vmem:[#allocation2 + $0x10] sm:$0xff]
    %v73 = vld [vmem:[#allocation2 + $0x18] sm:$0xff]
    %v74 = vld [vmem:[#allocation2 + $0x20] sm:$0xff]
    %v75 = vld [vmem:[#allocation2 + $0x28] sm:$0xff]
    %v76 = vld [vmem:[#allocation2 + $0x30] sm:$0xff]
    %v77 = vld [vmem:[#allocation2 + $0x38] sm:$0xff]
    %v78 = vld [vmem:[%s2] sm:$0xf]
    %v80 = vlaneseq
    %v81 = vshrl.u32 %v80, 7
    %v82 = vsub.s32 0, %v81
    %v83 = vrot.slane %v78, %v82
    %v84 = vlaneseq
    %v85 = vshrl.u32 %v84, 7
    %v86 = vsub.s32 1, %v85
    %v87 = vrot.slane %v78, %v86
    %v88 = vlaneseq
    %v89 = vshrl.u32 %v88, 7
    %v90 = vsub.s32 2, %v89
    %v91 = vrot.slane %v78, %v90
    %v92 = vlaneseq
    %v93 = vshrl.u32 %v92, 7
    %v94 = vsub.s32 3, %v93
    %v95 = vrot.slane %v78, %v94
    %v108 = vunpack.c.l.b16 %v70
    %v109 = vunpack.c.h.b16 %v70
    %v110 = vunpack.c.l.b16 %v71
    %v111 = vunpack.c.h.b16 %v71
    %v112 = vunpack.c.l.b16 %v72
    %v113 = vunpack.c.h.b16 %v72
    %v114 = vunpack.c.l.b16 %v73
    %v115 = vunpack.c.h.b16 %v73
    %v116 = vunpack.c.l.b16 %v74
    %v117 = vunpack.c.h.b16 %v74
    %v118 = vunpack.c.l.b16 %v75
    %v119 = vunpack.c.h.b16 %v75
    %v120 = vunpack.c.l.b16 %v76
    %v121 = vunpack.c.h.b16 %v76
    %v122 = vunpack.c.l.b16 %v77
    %v123 = vunpack.c.h.b16 %v77
    %v124 = vpack.c.b16 %v112, %v108
    %v125 = vpack.c.b16 %v113, %v109
    %v126 = vpack.c.b16 %v114, %v110
    %v127 = vpack.c.b16 %v115, %v111
    %v128 = vpack.c.b16 %v120, %v116
    %v129 = vpack.c.b16 %v121, %v117
    %v130 = vpack.c.b16 %v122, %v118
    %v131 = vpack.c.b16 %v123, %v119
    %vm140 = vcmask 261120
    %v142 = vsel %vm140, %v69, 0
    %144 = vmatprep.subr.bf16.mxu0 %v125
    %145 = vmatpush1.bf16.msra.mxu0 %v124
    %146 = vmatprep.subr.bf16.mxu0 %v129
    %147 = vmatpush1.bf16.msra.mxu0 %v128
    %148 = vmatprep.subr.bf16.mxu0 0
    %149 = vmatpush1.bf16.msra.mxu0 0
    %150 = vmatprep.subr.bf16.mxu0 0
    %151 = vmatpush1.bf16.msra.mxu0 0
    %152 = vmatprep.subr.bf16.mxu0 0
    %153 = vmatpush1.bf16.msra.mxu0 0
    %154 = vmatprep.subr.bf16.mxu0 0
    %155 = vmatpush1.bf16.msra.mxu0 0
    %156 = vmatprep.subr.bf16.mxu0 0
    %157 = vmatpush1.bf16.msra.mxu0 0
    %158 = vmatprep.subr.bf16.mxu0 0
    %159 = vmatpush1.bf16.msra.mxu0 0
    %160 = vmatprep.subr.bf16.mxu0 0
    %161 = vmatpush1.bf16.msra.mxu0 0
    %162 = vmatprep.subr.bf16.mxu0 0
    %163 = vmatpush1.bf16.msra.mxu0 0
    %164 = vmatprep.subr.bf16.mxu0 0
    %165 = vmatpush1.bf16.msra.mxu0 0
    %166 = vmatprep.subr.bf16.mxu0 0
    %167 = vmatpush1.bf16.msra.mxu0 0
    %168 = vmatprep.subr.bf16.mxu0 0
    %169 = vmatpush1.bf16.msra.mxu0 0
    %170 = vmatprep.subr.bf16.mxu0 0
    %171 = vmatpush1.bf16.msra.mxu0 0
    %172 = vmatprep.subr.bf16.mxu0 0
    %173 = vmatpush1.bf16.msra.mxu0 0
    %174 = vmatprep.subr.bf16.mxu0 0
    %175 = vmatpush1.bf16.msra.mxu0 0
    %176 = vmatprep.mubr.bf16.mxu0 0
    %177 = vmatmul.mubr.bf16.gmra.mrb[0].mxu0 %v142
    %v178 = vpop.f32.mrb[0].mxu0
    %v179 = vadd.f32 %v83, %v178
    %v180 = vpop.f32.mrb[0].mxu0
    %v181 = vadd.f32 %v87, %v180
    %v182 = vpop.f32.mrb[0].mxu0
    %v183 = vpop.f32.mrb[0].mxu0
    %184 = vdwg.mxu0
    %185 = vmatprep.subr.bf16.mxu0 %v127
    %186 = vmatpush1.bf16.msra.mxu0 %v126
    %187 = vmatprep.subr.bf16.mxu0 %v131
    %188 = vmatpush1.bf16.msra.mxu0 %v130
    %189 = vmatprep.subr.bf16.mxu0 0
    %190 = vmatpush1.bf16.msra.mxu0 0
    %191 = vmatprep.subr.bf16.mxu0 0
    %192 = vmatpush1.bf16.msra.mxu0 0
    %193 = vmatprep.subr.bf16.mxu0 0
    %194 = vmatpush1.bf16.msra.mxu0 0
    %195 = vmatprep.subr.bf16.mxu0 0
    %196 = vmatpush1.bf16.msra.mxu0 0
    %197 = vmatprep.subr.bf16.mxu0 0
    %198 = vmatpush1.bf16.msra.mxu0 0
    %199 = vmatprep.subr.bf16.mxu0 0
    %200 = vmatpush1.bf16.msra.mxu0 0
    %201 = vmatprep.subr.bf16.mxu0 0
    %202 = vmatpush1.bf16.msra.mxu0 0
    %203 = vmatprep.subr.bf16.mxu0 0
    %204 = vmatpush1.bf16.msra.mxu0 0
    %205 = vmatprep.subr.bf16.mxu0 0
    %206 = vmatpush1.bf16.msra.mxu0 0
    %207 = vmatprep.subr.bf16.mxu0 0
    %208 = vmatpush1.bf16.msra.mxu0 0
    %209 = vmatprep.subr.bf16.mxu0 0
    %210 = vmatpush1.bf16.msra.mxu0 0
    %211 = vmatprep.subr.bf16.mxu0 0
    %212 = vmatpush1.bf16.msra.mxu0 0
    %213 = vmatprep.subr.bf16.mxu0 0
    %214 = vmatpush1.bf16.msra.mxu0 0
    %215 = vmatprep.subr.bf16.mxu0 0
    %216 = vmatpush1.bf16.msra.mxu0 0
    %217 = vmatprep.mubr.bf16.mxu0 0
    %218 = vmatmul.mubr.bf16.gmra.mrb[0].mxu0 %v142
    %v219 = vpop.f32.mrb[0].mxu0
    %v220 = vadd.f32 %v91, %v219
    %v221 = vpop.f32.mrb[0].mxu0
    %v222 = vadd.f32 %v95, %v221
    %v223 = vpop.f32.mrb[0].mxu0
    %v224 = vpop.f32.mrb[0].mxu0
    %225 = vdwg.mxu0
    %v226 = vmax.f32 %v179, 0.0
    %v227 = vmax.f32 %v181, 0.0
    %v228 = vmax.f32 %v220, 0.0
    %v229 = vmax.f32 %v222, 0.0
    %v230 = vpack.c.bf16 %v226, %v226
    %v231 = vpack.c.bf16 %v227, %v227
    %v232 = vpack.c.bf16 %v228, %v228
    %v233 = vpack.c.bf16 %v229, %v229
    %v234 = vld [vmem:[#allocation5] sm:$0xf]
    %v235 = vld [vmem:[#allocation5 + $0x4] sm:$0xf]
    %v236 = vld [vmem:[#allocation5 + $0x8] sm:$0xf]
    %v237 = vld [vmem:[#allocation5 + $0xc] sm:$0xf]
    %v238 = vld [vmem:[#allocation5 + $0x10] sm:$0xf]
    %v239 = vld [vmem:[#allocation5 + $0x14] sm:$0xf]
    %v240 = vld [vmem:[#allocation5 + $0x18] sm:$0xf]
    %v241 = vld [vmem:[#allocation5 + $0x1c] sm:$0xf]
    %v242 = vld [vmem:[#allocation5 + $0x20] sm:$0xf]
    %v243 = vld [vmem:[#allocation5 + $0x24] sm:$0xf]
    %v244 = vld [vmem:[#allocation5 + $0x28] sm:$0xf]
    %v245 = vld [vmem:[#allocation5 + $0x2c] sm:$0xf]
    %v246 = vld [vmem:[#allocation5 + $0x30] sm:$0xf]
    %v247 = vld [vmem:[#allocation5 + $0x34] sm:$0xf]
    %v248 = vld [vmem:[#allocation5 + $0x38] sm:$0xf]
    %v249 = vld [vmem:[#allocation5 + $0x3c] sm:$0xf]
    %v250 = vld [vmem:[#allocation5 + $0x40] sm:$0xf]
    %v251 = vld [vmem:[#allocation5 + $0x44] sm:$0xf]
    %v252 = vld [vmem:[#allocation5 + $0x48] sm:$0xf]
    %v253 = vld [vmem:[#allocation5 + $0x4c] sm:$0xf]
    %v254 = vld [vmem:[#allocation5 + $0x50] sm:$0xf]
    %v255 = vld [vmem:[#allocation5 + $0x54] sm:$0xf]
    %v256 = vld [vmem:[#allocation5 + $0x58] sm:$0xf]
    %v257 = vld [vmem:[#allocation5 + $0x5c] sm:$0xf]
    %v258 = vld [vmem:[#allocation5 + $0x60] sm:$0xf]
    %v259 = vld [vmem:[#allocation5 + $0x64] sm:$0xf]
    %v260 = vld [vmem:[#allocation5 + $0x68] sm:$0xf]
    %v261 = vld [vmem:[#allocation5 + $0x6c] sm:$0xf]
    %v262 = vld [vmem:[#allocation5 + $0x70] sm:$0xf]
    %v263 = vld [vmem:[#allocation5 + $0x74] sm:$0xf]
    %v264 = vld [vmem:[#allocation5 + $0x78] sm:$0xf]
    %v265 = vld [vmem:[#allocation5 + $0x7c] sm:$0xf]
    %v266 = vld [vmem:[#allocation5 + $0x80] sm:$0xf]
    %v267 = vld [vmem:[#allocation5 + $0x84] sm:$0xf]
    %v268 = vld [vmem:[#allocation5 + $0x88] sm:$0xf]
    %v269 = vld [vmem:[#allocation5 + $0x8c] sm:$0xf]
    %v270 = vld [vmem:[#allocation5 + $0x90] sm:$0xf]
    %v271 = vld [vmem:[#allocation5 + $0x94] sm:$0xf]
    %v272 = vld [vmem:[#allocation5 + $0x98] sm:$0xf]
    %v273 = vld [vmem:[#allocation5 + $0x9c] sm:$0xf]
    %v274 = vld [vmem:[#allocation5 + $0xa0] sm:$0xf]
    %v275 = vld [vmem:[#allocation5 + $0xa4] sm:$0xf]
    %v276 = vld [vmem:[#allocation5 + $0xa8] sm:$0xf]
    %v277 = vld [vmem:[#allocation5 + $0xac] sm:$0xf]
    %v278 = vld [vmem:[#allocation5 + $0xb0] sm:$0xf]
    %v279 = vld [vmem:[#allocation5 + $0xb4] sm:$0xf]
    %v280 = vld [vmem:[#allocation5 + $0xb8] sm:$0xf]
    %v281 = vld [vmem:[#allocation5 + $0xbc] sm:$0xf]
    %v282 = vld [vmem:[#allocation5 + $0xc0] sm:$0xf]
    %v283 = vld [vmem:[#allocation5 + $0xc4] sm:$0xf]
    %v284 = vld [vmem:[#allocation5 + $0xc8] sm:$0xf]
    %v285 = vld [vmem:[#allocation5 + $0xcc] sm:$0xf]
    %v286 = vld [vmem:[#allocation5 + $0xd0] sm:$0xf]
    %v287 = vld [vmem:[#allocation5 + $0xd4] sm:$0xf]
    %v288 = vld [vmem:[#allocation5 + $0xd8] sm:$0xf]
    %v289 = vld [vmem:[#allocation5 + $0xdc] sm:$0xf]
    %v290 = vld [vmem:[#allocation5 + $0xe0] sm:$0xf]
    %v291 = vld [vmem:[#allocation5 + $0xe4] sm:$0xf]
    %v292 = vld [vmem:[#allocation5 + $0xe8] sm:$0xf]
    %v293 = vld [vmem:[#allocation5 + $0xec] sm:$0xf]
    %v294 = vld [vmem:[#allocation5 + $0xf0] sm:$0xf]
    %v295 = vld [vmem:[#allocation5 + $0xf4] sm:$0xf]
    %v296 = vld [vmem:[#allocation5 + $0xf8] sm:$0xf]
    %v297 = vld [vmem:[#allocation5 + $0xfc] sm:$0xf]
    %v298 = vld [vmem:[%s4] sm:$0x1]
    %v300 = vlaneseq
    %v301 = vshrl.u32 %v300, 7
    %v302 = vsub.s32 0, %v301
    %v303 = vrot.slane %v298, %v302
    %v369 = vunpack.c.l.b16 %v234
    %v370 = vunpack.c.l.b16 %v235
    %v371 = vunpack.c.l.b16 %v236
    %v372 = vunpack.c.l.b16 %v237
    %v373 = vunpack.c.l.b16 %v238
    %v374 = vunpack.c.l.b16 %v239
    %v375 = vunpack.c.l.b16 %v240
    %v376 = vunpack.c.l.b16 %v241
    %v377 = vunpack.c.l.b16 %v242
    %v378 = vunpack.c.l.b16 %v243
    %v379 = vunpack.c.l.b16 %v244
    %v380 = vunpack.c.l.b16 %v245
    %v381 = vunpack.c.l.b16 %v246
    %v382 = vunpack.c.l.b16 %v247
    %v383 = vunpack.c.l.b16 %v248
    %v384 = vunpack.c.l.b16 %v249
    %v385 = vunpack.c.l.b16 %v250
    %v386 = vunpack.c.l.b16 %v251
    %v387 = vunpack.c.l.b16 %v252
    %v388 = vunpack.c.l.b16 %v253
    %v389 = vunpack.c.l.b16 %v254
    %v390 = vunpack.c.l.b16 %v255
    %v391 = vunpack.c.l.b16 %v256
    %v392 = vunpack.c.l.b16 %v257
    %v393 = vunpack.c.l.b16 %v258
    %v394 = vunpack.c.l.b16 %v259
    %v395 = vunpack.c.l.b16 %v260
    %v396 = vunpack.c.l.b16 %v261
    %v397 = vunpack.c.l.b16 %v262
    %v398 = vunpack.c.l.b16 %v263
    %v399 = vunpack.c.l.b16 %v264
    %v400 = vunpack.c.l.b16 %v265
    %v401 = vunpack.c.l.b16 %v266
    %v402 = vunpack.c.l.b16 %v267
    %v403 = vunpack.c.l.b16 %v268
    %v404 = vunpack.c.l.b16 %v269
    %v405 = vunpack.c.l.b16 %v270
    %v406 = vunpack.c.l.b16 %v271
    %v407 = vunpack.c.l.b16 %v272
    %v408 = vunpack.c.l.b16 %v273
    %v409 = vunpack.c.l.b16 %v274
    %v410 = vunpack.c.l.b16 %v275
    %v411 = vunpack.c.l.b16 %v276
    %v412 = vunpack.c.l.b16 %v277
    %v413 = vunpack.c.l.b16 %v278
    %v414 = vunpack.c.l.b16 %v279
    %v415 = vunpack.c.l.b16 %v280
    %v416 = vunpack.c.l.b16 %v281
    %v417 = vunpack.c.l.b16 %v282
    %v418 = vunpack.c.l.b16 %v283
    %v419 = vunpack.c.l.b16 %v284
    %v420 = vunpack.c.l.b16 %v285
    %v421 = vunpack.c.l.b16 %v286
    %v422 = vunpack.c.l.b16 %v287
    %v423 = vunpack.c.l.b16 %v288
    %v424 = vunpack.c.l.b16 %v289
    %v425 = vunpack.c.l.b16 %v290
    %v426 = vunpack.c.l.b16 %v291
    %v427 = vunpack.c.l.b16 %v292
    %v428 = vunpack.c.l.b16 %v293
    %v429 = vunpack.c.l.b16 %v294
    %v430 = vunpack.c.l.b16 %v295
    %v431 = vunpack.c.l.b16 %v296
    %v432 = vunpack.c.l.b16 %v297
    %v433 = vpack.c.b16 %v370, %v369
    %v434 = vpack.c.b16 %v372, %v371
    %v435 = vpack.c.b16 %v374, %v373
    %v436 = vpack.c.b16 %v376, %v375
    %v437 = vpack.c.b16 %v378, %v377
    %v438 = vpack.c.b16 %v380, %v379
    %v439 = vpack.c.b16 %v382, %v381
    %v440 = vpack.c.b16 %v384, %v383
    %v441 = vpack.c.b16 %v386, %v385
    %v442 = vpack.c.b16 %v388, %v387
    %v443 = vpack.c.b16 %v390, %v389
    %v444 = vpack.c.b16 %v392, %v391
    %v445 = vpack.c.b16 %v394, %v393
    %v446 = vpack.c.b16 %v396, %v395
    %v447 = vpack.c.b16 %v398, %v397
    %v448 = vpack.c.b16 %v400, %v399
    %v449 = vpack.c.b16 %v402, %v401
    %v450 = vpack.c.b16 %v404, %v403
    %v451 = vpack.c.b16 %v406, %v405
    %v452 = vpack.c.b16 %v408, %v407
    %v453 = vpack.c.b16 %v410, %v409
    %v454 = vpack.c.b16 %v412, %v411
    %v455 = vpack.c.b16 %v414, %v413
    %v456 = vpack.c.b16 %v416, %v415
    %v457 = vpack.c.b16 %v418, %v417
    %v458 = vpack.c.b16 %v420, %v419
    %v459 = vpack.c.b16 %v422, %v421
    %v460 = vpack.c.b16 %v424, %v423
    %v461 = vpack.c.b16 %v426, %v425
    %v462 = vpack.c.b16 %v428, %v427
    %v463 = vpack.c.b16 %v430, %v429
    %v464 = vpack.c.b16 %v432, %v431
    %497 = vmatprep.subr.bf16.mxu0 0
    %498 = vmatpush1.bf16.msra.mxu0 %v433
    %499 = vmatprep.subr.bf16.mxu0 0
    %500 = vmatpush1.bf16.msra.mxu0 %v434
    %501 = vmatprep.subr.bf16.mxu0 0
    %502 = vmatpush1.bf16.msra.mxu0 %v435
    %503 = vmatprep.subr.bf16.mxu0 0
    %504 = vmatpush1.bf16.msra.mxu0 %v436
    %505 = vmatprep.subr.bf16.mxu0 0
    %506 = vmatpush1.bf16.msra.mxu0 %v437
    %507 = vmatprep.subr.bf16.mxu0 0
    %508 = vmatpush1.bf16.msra.mxu0 %v438
    %509 = vmatprep.subr.bf16.mxu0 0
    %510 = vmatpush1.bf16.msra.mxu0 %v439
    %511 = vmatprep.subr.bf16.mxu0 0
    %512 = vmatpush1.bf16.msra.mxu0 %v440
    %513 = vmatprep.subr.bf16.mxu0 0
    %514 = vmatpush1.bf16.msra.mxu0 %v441
    %515 = vmatprep.subr.bf16.mxu0 0
    %516 = vmatpush1.bf16.msra.mxu0 %v442
    %517 = vmatprep.subr.bf16.mxu0 0
    %518 = vmatpush1.bf16.msra.mxu0 %v443
    %519 = vmatprep.subr.bf16.mxu0 0
    %520 = vmatpush1.bf16.msra.mxu0 %v444
    %521 = vmatprep.subr.bf16.mxu0 0
    %522 = vmatpush1.bf16.msra.mxu0 %v445
    %523 = vmatprep.subr.bf16.mxu0 0
    %524 = vmatpush1.bf16.msra.mxu0 %v446
    %525 = vmatprep.subr.bf16.mxu0 0
    %526 = vmatpush1.bf16.msra.mxu0 %v447
    %527 = vmatprep.subr.bf16.mxu0 0
    %528 = vmatpush1.bf16.msra.mxu0 %v448
    %529 = vmatprep.mubr.bf16.mxu0 %v231
    %530 = vmatmul.mubr.bf16.gmra.mrb[0].mxu0 %v230
    %v531 = vpop.f32.mrb[0].mxu0
    %v532 = vadd.f32 %v303, %v531
    %v533 = vpop.f32.mrb[0].mxu0
    %v534 = vpop.f32.mrb[0].mxu0
    %v535 = vpop.f32.mrb[0].mxu0
    %536 = vdwg.mxu0
    %537 = vmatprep.subr.bf16.mxu0 0
    %538 = vmatpush1.bf16.msra.mxu0 %v449
    %539 = vmatprep.subr.bf16.mxu0 0
    %540 = vmatpush1.bf16.msra.mxu0 %v450
    %541 = vmatprep.subr.bf16.mxu0 0
    %542 = vmatpush1.bf16.msra.mxu0 %v451
    %543 = vmatprep.subr.bf16.mxu0 0
    %544 = vmatpush1.bf16.msra.mxu0 %v452
    %545 = vmatprep.subr.bf16.mxu0 0
    %546 = vmatpush1.bf16.msra.mxu0 %v453
    %547 = vmatprep.subr.bf16.mxu0 0
    %548 = vmatpush1.bf16.msra.mxu0 %v454
    %549 = vmatprep.subr.bf16.mxu0 0
    %550 = vmatpush1.bf16.msra.mxu0 %v455
    %551 = vmatprep.subr.bf16.mxu0 0
    %552 = vmatpush1.bf16.msra.mxu0 %v456
    %553 = vmatprep.subr.bf16.mxu0 0
    %554 = vmatpush1.bf16.msra.mxu0 %v457
    %555 = vmatprep.subr.bf16.mxu0 0
    %556 = vmatpush1.bf16.msra.mxu0 %v458
    %557 = vmatprep.subr.bf16.mxu0 0
    %558 = vmatpush1.bf16.msra.mxu0 %v459
    %559 = vmatprep.subr.bf16.mxu0 0
    %560 = vmatpush1.bf16.msra.mxu0 %v460
    %561 = vmatprep.subr.bf16.mxu0 0
    %562 = vmatpush1.bf16.msra.mxu0 %v461
    %563 = vmatprep.subr.bf16.mxu0 0
    %564 = vmatpush1.bf16.msra.mxu0 %v462
    %565 = vmatprep.subr.bf16.mxu0 0
    %566 = vmatpush1.bf16.msra.mxu0 %v463
    %567 = vmatprep.subr.bf16.mxu0 0
    %568 = vmatpush1.bf16.msra.mxu0 %v464
    %569 = vmatprep.mubr.bf16.mxu0 %v233
    %570 = vmatmul.mubr.bf16.gmra.mrb[0].mxu0 %v232
    %v571 = vpop.f32.mrb[0].mxu0
    %v572 = vadd.f32 %v532, %v571
    %v573 = vpop.f32.mrb[0].mxu0
    %v574 = vpop.f32.mrb[0].mxu0
    %v575 = vpop.f32.mrb[0].mxu0
    %576 = vdwg.mxu0
    %v577 = vmax.f32 %v572, 0.0
    %v578 = vpack.c.bf16 %v577, %v577
    %v579 = vld [vmem:[#allocation7] sm:$0xf]
    %v580 = vld [vmem:[#allocation7 + $0x4] sm:$0xf]
    %v581 = vld [vmem:[#allocation7 + $0x8] sm:$0xf]
    %v582 = vld [vmem:[#allocation7 + $0xc] sm:$0xf]
    %v583 = vld [vmem:[#allocation7 + $0x10] sm:$0xf]
    %v584 = vld [vmem:[#allocation7 + $0x14] sm:$0xf]
    %v585 = vld [vmem:[#allocation7 + $0x18] sm:$0xf]
    %v586 = vld [vmem:[#allocation7 + $0x1c] sm:$0xf]
    %v587 = vld [vmem:[#allocation7 + $0x20] sm:$0xf]
    %v588 = vld [vmem:[#allocation7 + $0x24] sm:$0xf]
    %v589 = vld [vmem:[#allocation7 + $0x28] sm:$0xf]
    %v590 = vld [vmem:[#allocation7 + $0x2c] sm:$0xf]
    %v591 = vld [vmem:[#allocation7 + $0x30] sm:$0xf]
    %v592 = vld [vmem:[#allocation7 + $0x34] sm:$0xf]
    %v593 = vld [vmem:[#allocation7 + $0x38] sm:$0xf]
    %v594 = vld [vmem:[#allocation7 + $0x3c] sm:$0xf]
    %v595 = vld [vmem:[%s6] sm:$0x1]
    %v597 = vlaneseq
    %v598 = vshrl.u32 %v597, 7
    %v599 = vsub.s32 0, %v598
    %v600 = vrot.slane %v595, %v599
    %v618 = vunpack.c.l.b16 %v579
    %v619 = vunpack.c.l.b16 %v580
    %v620 = vunpack.c.l.b16 %v581
    %v621 = vunpack.c.l.b16 %v582
    %v622 = vunpack.c.l.b16 %v583
    %v623 = vunpack.c.l.b16 %v584
    %v624 = vunpack.c.l.b16 %v585
    %v625 = vunpack.c.l.b16 %v586
    %v626 = vunpack.c.l.b16 %v587
    %v627 = vunpack.c.l.b16 %v588
    %v628 = vunpack.c.l.b16 %v589
    %v629 = vunpack.c.l.b16 %v590
    %v630 = vunpack.c.l.b16 %v591
    %v631 = vunpack.c.l.b16 %v592
    %v632 = vunpack.c.l.b16 %v593
    %v633 = vunpack.c.l.b16 %v594
    %v634 = vpack.c.b16 %v619, %v618
    %v635 = vpack.c.b16 %v621, %v620
    %v636 = vpack.c.b16 %v623, %v622
    %v637 = vpack.c.b16 %v625, %v624
    %v638 = vpack.c.b16 %v627, %v626
    %v639 = vpack.c.b16 %v629, %v628
    %v640 = vpack.c.b16 %v631, %v630
    %v641 = vpack.c.b16 %v633, %v632
    %650 = vmatprep.subr.bf16.mxu0 0
    %651 = vmatpush1.bf16.msra.mxu0 %v634
    %652 = vmatprep.subr.bf16.mxu0 0
    %653 = vmatpush1.bf16.msra.mxu0 %v635
    %654 = vmatprep.subr.bf16.mxu0 0
    %655 = vmatpush1.bf16.msra.mxu0 %v636
    %656 = vmatprep.subr.bf16.mxu0 0
    %657 = vmatpush1.bf16.msra.mxu0 %v637
    %658 = vmatprep.subr.bf16.mxu0 0
    %659 = vmatpush1.bf16.msra.mxu0 %v638
    %660 = vmatprep.subr.bf16.mxu0 0
    %661 = vmatpush1.bf16.msra.mxu0 %v639
    %662 = vmatprep.subr.bf16.mxu0 0
    %663 = vmatpush1.bf16.msra.mxu0 %v640
    %664 = vmatprep.subr.bf16.mxu0 0
    %665 = vmatpush1.bf16.msra.mxu0 %v641
    %666 = vmatprep.subr.bf16.mxu0 0
    %667 = vmatpush1.bf16.msra.mxu0 0
    %668 = vmatprep.subr.bf16.mxu0 0
    %669 = vmatpush1.bf16.msra.mxu0 0
    %670 = vmatprep.subr.bf16.mxu0 0
    %671 = vmatpush1.bf16.msra.mxu0 0
    %672 = vmatprep.subr.bf16.mxu0 0
    %673 = vmatpush1.bf16.msra.mxu0 0
    %674 = vmatprep.subr.bf16.mxu0 0
    %675 = vmatpush1.bf16.msra.mxu0 0
    %676 = vmatprep.subr.bf16.mxu0 0
    %677 = vmatpush1.bf16.msra.mxu0 0
    %678 = vmatprep.subr.bf16.mxu0 0
    %679 = vmatpush1.bf16.msra.mxu0 0
    %680 = vmatprep.subr.bf16.mxu0 0
    %681 = vmatpush1.bf16.msra.mxu0 0
    %682 = vmatprep.mubr.bf16.mxu0 0
    %683 = vmatmul.mubr.bf16.gmra.mrb[0].mxu0 %v578
    %v684 = vpop.f32.mrb[0].mxu0
    %v685 = vadd.f32 %v600, %v684
    %v686 = vpop.f32.mrb[0].mxu0
    %v687 = vpop.f32.mrb[0].mxu0
    %v688 = vpop.f32.mrb[0].mxu0
    %689 = vdwg.mxu0
    %690 = vst [vmem:[#allocation8] sm:$0xff] %v685
    // Predicated region
    $region42: #{ffnn_forward.1} parent=1 // pred_check
      _
    $region43: #{ffnn_forward.1} parent=1 // pred_check_branch
      %692 = sbr.rel (0) target = $region45
    $region44: #{ffnn_forward.1} parent=1 // pred_region
      %s694 = ssub.s32 128, 128
      %695 = vsyncadd [#allocation4], %s694
      %s697 = sshll.u32 [#allocation8], 4
      %s698 = int_to_ptr.vmem [resolvable:$true] %s697
      %700 = dma.vmem_to_hbm [thread:$0]  %s698, 128, %s7, [#allocation4]
    $region45: #{ffnn_forward.1} parent=1 // pred_fallthru
      _
    // Predicated region
    $region46: #{ffnn_forward.1} parent=1 // pred_check
      _
    $region47: #{ffnn_forward.1} parent=1 // pred_check_branch
      %702 = sbr.rel (0) target = $region49
    $region48: #{ffnn_forward.1} parent=1 // pred_region
      %703 = dma.done [#allocation4], 128
    $region49: #{ffnn_forward.1} parent=1 // pred_fallthru
      _
    %704 = vsyncpa [#allocation3], 1
    %705 = vsyncpa [#allocation6], 1
    %706 = vsyncpa [#allocation4], 1

</llo_original>
